<compile_context>
chip_gen: v7x
topology: tpu7x:2x2x1
jax: 0.10.0
libtpu: 0.0.40
codegen_flags: <defaults>
</compile_context>

<pallas_src>
import functools

import numpy as np

import jax
import jax.numpy as jnp
from jax import lax
from jax.experimental import pallas as pl
from jax.experimental.pallas import tpu as pltpu

LANE = 128
SUBLANE = 8


def _round_up(v, m):
    return ((v + m - 1) // m) * m


# ----------------------------------------------------------------------------
# Fused kernel: conv1+relu+pool, conv2+relu+pool, LSTM over time, FC.
# One batch block per grid step; everything VMEM-resident.
# ----------------------------------------------------------------------------
def cnn_lstm_kernel(x_ref, w1_ref, b1_ref, w2_ref, b2_ref,
                    wih_ref, whh_ref, bl_ref, wfc_ref, bfc_ref,
                    out_ref, gx_ref):
    f32 = jnp.float32
    x = x_ref[...]                                        # (L, Bb, Cin)

    def conv_relu_pool(h, w_ref, b_ref):
        # Conv1d(kernel=3, padding=1) as ONE matmul against taps packed as
        # (3*Cin, Co).  The shifted views come from a single zero-padded
        # buffer with static major-axis slices, stacked on the channel axis.
        L, Bb, C = h.shape
        w = w_ref[...]
        Co = w.shape[-1]
        z = jnp.zeros((1, Bb, C), f32)
        xp = jnp.concatenate([z, h, z], axis=0)           # (L+2, Bb, C)
        taps = jnp.concatenate(
            [xp[0:L], xp[1:L + 1], xp[2:L + 2]], axis=-1)  # (L, Bb, 3C)
        y = (jnp.dot(taps.reshape(L * Bb, 3 * C).astype(w.dtype), w,
                     preferred_element_type=f32)
             + b_ref[...])                                 # (L*Bb, Co)
        y = jnp.maximum(y, 0.0).reshape(L, Bb, Co)         # ReLU
        Lh = L // 2                                        # MaxPool1d(2), floor
        y = y[:2 * Lh].reshape(Lh, 2, Bb, Co)              # leading-dim split
        return jnp.maximum(y[:, 0], y[:, 1])               # (Lh, Bb, Co)

    h1 = conv_relu_pool(x, w1_ref, b1_ref)                 # (L/2, Bb, C0)
    # Dropout #1: identity in eval mode.
    h2 = conv_relu_pool(h1, w2_ref, b2_ref)                # (T, Bb, C1)
    # Dropout #2: identity in eval mode.

    T, Bb, C1 = h2.shape
    wih = wih_ref[...]
    G = wih.shape[-1]                                      # 4*Hg (gate-packed)
    Hg = G // 4

    # Input projection for ALL timesteps in one MXU matmul (bias folded in),
    # staged in VMEM scratch with T leading so each recurrence step reads one
    # (Bb, 4*Hg) slab via a cheap leading-axis dynamic index.
    gx_ref[...] = (jnp.dot(h2.reshape(T * Bb, C1).astype(wih.dtype), wih,
                           preferred_element_type=f32)
                   + bl_ref[...]).reshape(T, Bb, G)

    whh = whh_ref[...]

    def step(t, carry):
        h, c = carry
        gates = gx_ref[t] + jnp.dot(h.astype(whh.dtype), whh,
                                    preferred_element_type=f32)  # (Bb, 4*Hg)
        # PyTorch gate order: i, f, g, o.
        i_g = jax.nn.sigmoid(gates[:, 0 * Hg:1 * Hg])
        f_g = jax.nn.sigmoid(gates[:, 1 * Hg:2 * Hg])
        g_g = jnp.tanh(gates[:, 2 * Hg:3 * Hg])
        o_g = jax.nn.sigmoid(gates[:, 3 * Hg:4 * Hg])
        c = f_g * c + i_g * g_g
        h = o_g * jnp.tanh(c)
        return h, c

    h0 = jnp.zeros((Bb, Hg), f32)
    c0 = jnp.zeros((Bb, Hg), f32)
    h_last, _ = lax.fori_loop(0, T, step, (h0, c0), unroll=True)

    # lstm_out[:, -1, :] == final h.  Final Linear fused, lane-dense store.
    wfc = wfc_ref[...]
    out_ref[...] = (jnp.dot(h_last.astype(wfc.dtype), wfc,
                            preferred_element_type=f32) + bfc_ref[...])


# ----------------------------------------------------------------------------
# One-time parameter re-layout (done once, outside the per-call forward).
# ----------------------------------------------------------------------------
def prepare_params(params, input_size, cnn_channels, lstm_hidden, output_size,
                   *, mxu_dtype=jnp.float32):
    """Re-lay PyTorch-layout weights for the fused kernel.

    mxu_dtype: dtype of matmul weights (activations are cast in-kernel to
    match).  Use jnp.bfloat16 on v6e/v7x for native MXU rate; default float32
    keeps bit-tight agreement with the f32 reference.
    """
    c0, c1 = cnn_channels
    H = lstm_hidden
    # Tight gate packing when all four gates fit one 128-lane block; otherwise
    # pad each gate to its own lane-aligned block.
    Hg = H if 4 * H <= LANE else _round_up(H, LANE)
    Op = _round_up(output_size, LANE)
    f32 = jnp.float32

    # Conv taps: (Cout, Cin, 3) -> (3*Cin, Cout); row k*Cin + c = w[o, c, k],
    # matching the [prev | center | next] channel stacking in the kernel.
    w1 = jnp.transpose(params["conv1_w"].astype(f32), (2, 1, 0)).reshape(
        3 * input_size, c0)
    b1 = params["conv1_b"].reshape(1, c0).astype(f32)
    w2 = jnp.transpose(params["conv2_w"].astype(f32), (2, 1, 0)).reshape(
        3 * c0, c1)
    b2 = params["conv2_b"].reshape(1, c1).astype(f32)

    # LSTM: PyTorch layout (4H, in), gate order i,f,g,o.  Each gate occupies
    # an Hg-wide column block.  INVARIANT (only relevant when Hg > H): all
    # padded gate columns / padded hidden rows MUST be exactly zero so padded
    # hidden lanes stay identically zero through the recurrence; anything
    # nonzero there silently corrupts the result.
    def pack_gates(w, in_dim):
        out = jnp.zeros((in_dim, 4 * Hg), f32)
        for g in range(4):
            blk = w[g * H:(g + 1) * H, :].astype(f32)      # (H, in_dim)
            out = out.at[:, g * Hg:g * Hg + H].set(jnp.transpose(blk))
        return out

    wih = pack_gates(params["w_ih"], c1)                   # (C1, 4*Hg)
    whh = jnp.zeros((Hg, 4 * Hg), f32).at[:H, :].set(
        pack_gates(params["w_hh"], H))                     # (Hg, 4*Hg)

    bias = (params["b_ih"] + params["b_hh"]).astype(f32)
    bl = jnp.zeros((1, 4 * Hg), f32)
    for g in range(4):
        bl = bl.at[0, g * Hg:g * Hg + H].set(bias[g * H:(g + 1) * H])

    wfc = jnp.zeros((Hg, Op), f32).at[:H, :output_size].set(
        jnp.transpose(params["fc_w"].astype(f32)))
    bfc = jnp.zeros((1, Op), f32).at[0, :output_size].set(
        params["fc_b"].astype(f32))

    cast = lambda a: a.astype(mxu_dtype)
    return {"w1": cast(w1), "b1": b1, "w2": cast(w2), "b2": b2,
            "wih": cast(wih), "whh": cast(whh), "bl": bl,
            "wfc": cast(wfc), "bfc": bfc}


# ----------------------------------------------------------------------------
# Forward wrapper: pad batch to a block multiple, run the fused kernel with a
# batch-parallel grid, slice back to logical shapes.
# ----------------------------------------------------------------------------
@functools.partial(jax.jit, static_argnames=("out_size", "block_b"))
def cnn_lstm_forward(x, weights, *, out_size, block_b=8):
    B, L, Cin = x.shape
    assert block_b % SUBLANE == 0
    Bp = _round_up(max(B, block_b), block_b)

    # Time-leading layout for the CNN stage: (L, Bp, Cin).
    xt = jnp.zeros((L, Bp, Cin), jnp.float32)
    xt = xt.at[:, :B, :].set(jnp.transpose(x.astype(jnp.float32), (1, 0, 2)))

    G = weights["whh"].shape[1]                            # 4*Hg
    Op = weights["wfc"].shape[1]
    T = (L // 2) // 2                                      # two MaxPool(2)
    n_blocks = Bp // block_b

    def full_spec(a):
        return pl.BlockSpec(a.shape, lambda b: (0, 0))

    out_pad = pl.pallas_call(
        cnn_lstm_kernel,
        grid=(n_blocks,),
        in_specs=[
            pl.BlockSpec((L, block_b, Cin), lambda b: (0, b, 0)),
            full_spec(weights["w1"]), full_spec(weights["b1"]),
            full_spec(weights["w2"]), full_spec(weights["b2"]),
            full_spec(weights["wih"]), full_spec(weights["whh"]),
            full_spec(weights["bl"]),
            full_spec(weights["wfc"]), full_spec(weights["bfc"]),
        ],
        out_specs=pl.BlockSpec((block_b, Op), lambda b: (b, 0)),
        out_shape=jax.ShapeDtypeStruct((Bp, Op), jnp.float32),
        scratch_shapes=[pltpu.VMEM((T, block_b, G), jnp.float32)],
        compiler_params=pltpu.CompilerParams(
            dimension_semantics=("parallel",)),
    )(xt, weights["w1"], weights["b1"], weights["w2"], weights["b2"],
      weights["wih"], weights["whh"], weights["bl"],
      weights["wfc"], weights["bfc"])

    return out_pad[:B, :out_size]


# ----------------------------------------------------------------------------
# Pure-JAX reference (PyTorch-layout weights) for correctness checking.
# ----------------------------------------------------------------------------
def reference_forward(x, params):
    f32 = jnp.float32
    hi = jax.lax.Precision.HIGHEST

    def conv1d(h, w, b):                                   # h: (B, L, Cin)
        B, L, C = h.shape
        zrow = jnp.zeros((B, 1, C), f32)
        h_prev = jnp.concatenate([zrow, h[:, :-1, :]], axis=1)
        h_next = jnp.concatenate([h[:, 1:, :], zrow], axis=1)
        return (jnp.einsum("blc,oc->blo", h_prev, w[:, :, 0], precision=hi)
                + jnp.einsum("blc,oc->blo", h, w[:, :, 1], precision=hi)
                + jnp.einsum("blc,oc->blo", h_next, w[:, :, 2], precision=hi)
                + b)

    def pool(h):
        B, L, C = h.shape
        Lh = L // 2
        h4 = h[:, :2 * Lh, :].reshape(B, Lh, 2, C)
        return jnp.maximum(h4[:, :, 0, :], h4[:, :, 1, :])

    h = x.astype(f32)
    h = pool(jnp.maximum(conv1d(h, params["conv1_w"], params["conv1_b"]), 0.0))
    h = pool(jnp.maximum(conv1d(h, params["conv2_w"], params["conv2_b"]), 0.0))

    B, T, _ = h.shape
    H = params["w_hh"].shape[1]
    hh = jnp.zeros((B, H), f32)
    cc = jnp.zeros((B, H), f32)
    for t in range(T):
        gates = (jnp.einsum("bc,gc->bg", h[:, t, :], params["w_ih"], precision=hi)
                 + jnp.einsum("bh,gh->bg", hh, params["w_hh"], precision=hi)
                 + params["b_ih"] + params["b_hh"])
        i_g = jax.nn.sigmoid(gates[:, 0 * H:1 * H])
        f_g = jax.nn.sigmoid(gates[:, 1 * H:2 * H])
        g_g = jnp.tanh(gates[:, 2 * H:3 * H])
        o_g = jax.nn.sigmoid(gates[:, 3 * H:4 * H])
        cc = f_g * cc + i_g * g_g
        hh = o_g * jnp.tanh(cc)
    return jnp.einsum("bh,oh->bo", hh, params["fc_w"], precision=hi) + params["fc_b"]


# ----------------------------------------------------------------------------
# Deterministic PyTorch-style parameter init.
# ----------------------------------------------------------------------------
def init_params(key, input_size, cnn_channels, lstm_hidden, output_size):
    c0, c1 = cnn_channels
    f32 = jnp.float32

    def u(k, shape, bound):
        return jax.random.uniform(k, shape, f32, -bound, bound)

    keys = jax.random.split(key, 12)
    k1 = 1.0 / float(np.sqrt(input_size * 3))
    k2 = 1.0 / float(np.sqrt(c0 * 3))
    kl = 1.0 / float(np.sqrt(lstm_hidden))

    return {
        "conv1_w": u(keys[0], (c0, input_size, 3), k1),
        "conv1_b": u(keys[1], (c0,), k1),
        "conv2_w": u(keys[2], (c1, c0, 3), k2),
        "conv2_b": u(keys[3], (c1,), k2),
        "w_ih": u(keys[4], (4 * lstm_hidden, c1), kl),
        "w_hh": u(keys[5], (4 * lstm_hidden, lstm_hidden), kl),
        "b_ih": u(keys[6], (4 * lstm_hidden,), kl),
        "b_hh": u(keys[7], (4 * lstm_hidden,), kl),
        "fc_w": u(keys[8], (output_size, lstm_hidden), kl),
        "fc_b": u(keys[9], (output_size,), kl),
    }


if __name__ == "__main__":
    # Small shapes consistent with the module's forward:
    # x: (batch=2, seq=8, input_size=16), cnn_channels=(8, 16),
    # lstm_hidden=32, output_size=4.  seq=8 -> after two MaxPool(2): T=2.
    batch, seq, input_size = 2, 8, 16
    cnn_channels = (8, 16)
    lstm_hidden, output_size = 32, 4

    root = jax.random.PRNGKey(0)
    k_x, k_p = jax.random.split(root)
    x = jax.random.normal(k_x, (batch, seq, input_size), jnp.float32)

    params = init_params(k_p, input_size, cnn_channels, lstm_hidden, output_size)
    # mxu_dtype=jnp.bfloat16 is the v6e/v7x fast path; kept f32 here so the
    # result matches the f32 reference to 1e-3.
    weights = prepare_params(params, input_size, cnn_channels,
                             lstm_hidden, output_size, mxu_dtype=jnp.float32)

    out = cnn_lstm_forward(x, weights, out_size=output_size)
    jax.block_until_ready(out)
    assert out.shape == (batch, output_size)

    ref = reference_forward(x, params)
    np.testing.assert_allclose(np.asarray(out), np.asarray(ref),
                               rtol=1e-3, atol=1e-3)
    print("KERNEL_OK")
</pallas_src>

<mosaic_0001>
module attributes {stable_mosaic.version = 11 : i64} {
  func.func @cnn_lstm_kernel(%arg0: i32, %arg1: memref<8x8x16xf32, #tpu.memory_space<vmem>>, %arg2: memref<48x8xf32, #tpu.memory_space<vmem>>, %arg3: memref<1x8xf32, #tpu.memory_space<vmem>>, %arg4: memref<24x16xf32, #tpu.memory_space<vmem>>, %arg5: memref<1x16xf32, #tpu.memory_space<vmem>>, %arg6: memref<16x128xf32, #tpu.memory_space<vmem>>, %arg7: memref<32x128xf32, #tpu.memory_space<vmem>>, %arg8: memref<1x128xf32, #tpu.memory_space<vmem>>, %arg9: memref<32x128xf32, #tpu.memory_space<vmem>>, %arg10: memref<1x128xf32, #tpu.memory_space<vmem>>, %arg11: memref<8x128xf32, #tpu.memory_space<vmem>>, %arg12: memref<2x8x128xf32, #tpu.memory_space<vmem>>) attributes {dimension_semantics = [#tpu.dimension_semantics<parallel>], iteration_bounds = array<i64: 1>, scalar_prefetch = 0 : i64, scratch_operands = 1 : i64, tpu.core_type = #tpu.core_type<tc>, window_params = [{transform_indices = @transform_0, window_bounds = array<i64: 8, 8, 16>}, {pipeline_mode = #tpu.pipeline_mode<synchronous>, transform_indices = @transform_1, window_bounds = array<i64: 48, 8>}, {pipeline_mode = #tpu.pipeline_mode<synchronous>, transform_indices = @transform_2, window_bounds = array<i64: 1, 8>}, {pipeline_mode = #tpu.pipeline_mode<synchronous>, transform_indices = @transform_3, window_bounds = array<i64: 24, 16>}, {pipeline_mode = #tpu.pipeline_mode<synchronous>, transform_indices = @transform_4, window_bounds = array<i64: 1, 16>}, {pipeline_mode = #tpu.pipeline_mode<synchronous>, transform_indices = @transform_5, window_bounds = array<i64: 16, 128>}, {pipeline_mode = #tpu.pipeline_mode<synchronous>, transform_indices = @transform_6, window_bounds = array<i64: 32, 128>}, {pipeline_mode = #tpu.pipeline_mode<synchronous>, transform_indices = @transform_7, window_bounds = array<i64: 1, 128>}, {pipeline_mode = #tpu.pipeline_mode<synchronous>, transform_indices = @transform_8, window_bounds = array<i64: 32, 128>}, {pipeline_mode = #tpu.pipeline_mode<synchronous>, transform_indices = @transform_9, window_bounds = array<i64: 1, 128>}, {transform_indices = @transform_10, window_bounds = array<i64: 8, 128>}]} {
    %c0 = arith.constant 0 : index
    %c0_0 = arith.constant 0 : index
    %c0_1 = arith.constant 0 : index
    %0 = vector.load %arg1[%c0, %c0_0, %c0_1] : memref<8x8x16xf32, #tpu.memory_space<vmem>>, vector<8x8x16xf32>
    %c0_2 = arith.constant 0 : index
    %c0_3 = arith.constant 0 : index
    %1 = vector.load %arg2[%c0_2, %c0_3] : memref<48x8xf32, #tpu.memory_space<vmem>>, vector<48x8xf32>
    %cst = arith.constant 0.000000e+00 : f32
    %2 = vector.broadcast %cst : f32 to vector<1x8x16xf32>
    %3 = tpu.concatenate %2, %0, %2 in 0 : vector<1x8x16xf32>, vector<8x8x16xf32>, vector<1x8x16xf32> -> vector<10x8x16xf32>
    %4 = vector.extract_strided_slice %3 {offsets = [0, 0, 0], sizes = [8, 8, 16], strides = [1, 1, 1]} : vector<10x8x16xf32> to vector<8x8x16xf32>
    %5 = vector.extract_strided_slice %3 {offsets = [1, 0, 0], sizes = [8, 8, 16], strides = [1, 1, 1]} : vector<10x8x16xf32> to vector<8x8x16xf32>
    %6 = vector.extract_strided_slice %3 {offsets = [2, 0, 0], sizes = [8, 8, 16], strides = [1, 1, 1]} : vector<10x8x16xf32> to vector<8x8x16xf32>
    %7 = tpu.concatenate %4, %5, %6 in 2 : vector<8x8x16xf32>, vector<8x8x16xf32>, vector<8x8x16xf32> -> vector<8x8x48xf32>
    %8 = vector.shape_cast %7 : vector<8x8x48xf32> to vector<64x48xf32>
    %cst_4 = arith.constant dense<0.000000e+00> : vector<64x8xf32>
    %9 = tpu.matmul %8, %1, %cst_4 {dimension_numbers = #tpu.dot_dimension_numbers<[1], [0], [0], [1], [0, 0, 1, 1], [], []>} : vector<64x48xf32>, vector<48x8xf32>, vector<64x8xf32> -> vector<64x8xf32>
    %c0_5 = arith.constant 0 : index
    %c0_6 = arith.constant 0 : index
    %10 = vector.load %arg3[%c0_5, %c0_6] : memref<1x8xf32, #tpu.memory_space<vmem>>, vector<1x8xf32>
    %11 = vector.broadcast %10 : vector<1x8xf32> to vector<64x8xf32>
    %12 = arith.addf %9, %11 : vector<64x8xf32>
    %cst_7 = arith.constant 0.000000e+00 : f32
    %13 = vector.broadcast %cst_7 : f32 to vector<64x8xf32>
    %14 = arith.maximumf %12, %13 : vector<64x8xf32>
    %15 = vector.shape_cast %14 : vector<64x8xf32> to vector<8x8x8xf32>
    %16 = vector.shape_cast %15 : vector<8x8x8xf32> to vector<4x2x8x8xf32>
    %17 = vector.extract_strided_slice %16 {offsets = [0, 0, 0, 0], sizes = [4, 1, 8, 8], strides = [1, 1, 1, 1]} : vector<4x2x8x8xf32> to vector<4x1x8x8xf32>
    %18 = vector.shape_cast %17 : vector<4x1x8x8xf32> to vector<4x8x8xf32>
    %19 = vector.extract_strided_slice %16 {offsets = [0, 1, 0, 0], sizes = [4, 1, 8, 8], strides = [1, 1, 1, 1]} : vector<4x2x8x8xf32> to vector<4x1x8x8xf32>
    %20 = vector.shape_cast %19 : vector<4x1x8x8xf32> to vector<4x8x8xf32>
    %21 = arith.maximumf %18, %20 : vector<4x8x8xf32>
    %c0_8 = arith.constant 0 : index
    %c0_9 = arith.constant 0 : index
    %22 = vector.load %arg4[%c0_8, %c0_9] : memref<24x16xf32, #tpu.memory_space<vmem>>, vector<24x16xf32>
    %cst_10 = arith.constant 0.000000e+00 : f32
    %23 = vector.broadcast %cst_10 : f32 to vector<1x8x8xf32>
    %24 = tpu.concatenate %23, %21, %23 in 0 : vector<1x8x8xf32>, vector<4x8x8xf32>, vector<1x8x8xf32> -> vector<6x8x8xf32>
    %25 = vector.extract_strided_slice %24 {offsets = [0, 0, 0], sizes = [4, 8, 8], strides = [1, 1, 1]} : vector<6x8x8xf32> to vector<4x8x8xf32>
    %26 = vector.extract_strided_slice %24 {offsets = [1, 0, 0], sizes = [4, 8, 8], strides = [1, 1, 1]} : vector<6x8x8xf32> to vector<4x8x8xf32>
    %27 = vector.extract_strided_slice %24 {offsets = [2, 0, 0], sizes = [4, 8, 8], strides = [1, 1, 1]} : vector<6x8x8xf32> to vector<4x8x8xf32>
    %28 = tpu.concatenate %25, %26, %27 in 2 : vector<4x8x8xf32>, vector<4x8x8xf32>, vector<4x8x8xf32> -> vector<4x8x24xf32>
    %29 = vector.shape_cast %28 : vector<4x8x24xf32> to vector<32x24xf32>
    %cst_11 = arith.constant dense<0.000000e+00> : vector<32x16xf32>
    %30 = tpu.matmul %29, %22, %cst_11 {dimension_numbers = #tpu.dot_dimension_numbers<[1], [0], [0], [1], [0, 0, 1, 1], [], []>} : vector<32x24xf32>, vector<24x16xf32>, vector<32x16xf32> -> vector<32x16xf32>
    %c0_12 = arith.constant 0 : index
    %c0_13 = arith.constant 0 : index
    %31 = vector.load %arg5[%c0_12, %c0_13] : memref<1x16xf32, #tpu.memory_space<vmem>>, vector<1x16xf32>
    %32 = vector.broadcast %31 : vector<1x16xf32> to vector<32x16xf32>
    %33 = arith.addf %30, %32 : vector<32x16xf32>
    %cst_14 = arith.constant 0.000000e+00 : f32
    %34 = vector.broadcast %cst_14 : f32 to vector<32x16xf32>
    %35 = arith.maximumf %33, %34 : vector<32x16xf32>
    %36 = vector.shape_cast %35 : vector<32x16xf32> to vector<4x8x16xf32>
    %37 = vector.shape_cast %36 : vector<4x8x16xf32> to vector<2x2x8x16xf32>
    %38 = vector.extract_strided_slice %37 {offsets = [0, 0, 0, 0], sizes = [2, 1, 8, 16], strides = [1, 1, 1, 1]} : vector<2x2x8x16xf32> to vector<2x1x8x16xf32>
    %39 = vector.shape_cast %38 : vector<2x1x8x16xf32> to vector<2x8x16xf32>
    %40 = vector.extract_strided_slice %37 {offsets = [0, 1, 0, 0], sizes = [2, 1, 8, 16], strides = [1, 1, 1, 1]} : vector<2x2x8x16xf32> to vector<2x1x8x16xf32>
    %41 = vector.shape_cast %40 : vector<2x1x8x16xf32> to vector<2x8x16xf32>
    %42 = arith.maximumf %39, %41 : vector<2x8x16xf32>
    %c0_15 = arith.constant 0 : index
    %c0_16 = arith.constant 0 : index
    %43 = vector.load %arg6[%c0_15, %c0_16] : memref<16x128xf32, #tpu.memory_space<vmem>>, vector<16x128xf32>
    %44 = vector.shape_cast %42 : vector<2x8x16xf32> to vector<16x16xf32>
    %cst_17 = arith.constant dense<0.000000e+00> : vector<16x128xf32>
    %45 = tpu.matmul %44, %43, %cst_17 {dimension_numbers = #tpu.dot_dimension_numbers<[1], [0], [0], [1], [0, 0, 1, 1], [], []>} : vector<16x16xf32>, vector<16x128xf32>, vector<16x128xf32> -> vector<16x128xf32>
    %c0_18 = arith.constant 0 : index
    %c0_19 = arith.constant 0 : index
    %46 = vector.load %arg8[%c0_18, %c0_19] : memref<1x128xf32, #tpu.memory_space<vmem>>, vector<1x128xf32>
    %47 = vector.broadcast %46 : vector<1x128xf32> to vector<16x128xf32>
    %48 = arith.addf %45, %47 : vector<16x128xf32>
    %49 = vector.shape_cast %48 : vector<16x128xf32> to vector<2x8x128xf32>
    %c0_20 = arith.constant 0 : index
    %c0_21 = arith.constant 0 : index
    %c0_22 = arith.constant 0 : index
    %50 = vector.load %arg12[%c0_20, %c0_21, %c0_22] : memref<2x8x128xf32, #tpu.memory_space<vmem>>, vector<2x8x128xf32>
    tpu.vector_store %arg12[%c0_20, %c0_21, %c0_22], %49 {strides = array<i32>} : memref<2x8x128xf32, #tpu.memory_space<vmem>>, vector<2x8x128xf32>,
    %c0_23 = arith.constant 0 : index
    %c0_24 = arith.constant 0 : index
    %51 = vector.load %arg7[%c0_23, %c0_24] : memref<32x128xf32, #tpu.memory_space<vmem>>, vector<32x128xf32>
    %cst_25 = arith.constant 0.000000e+00 : f32
    %52 = vector.broadcast %cst_25 : f32 to vector<8x32xf32>
    %cst_26 = arith.constant 0.000000e+00 : f32
    %53 = vector.broadcast %cst_26 : f32 to vector<8x32xf32>
    %c0_i32 = arith.constant 0 : i32
    %54 = arith.index_cast %c0_i32 : i32 to index
    %c0_27 = arith.constant 0 : index
    %c0_28 = arith.constant 0 : index
    %55 = vector.load %arg12[%54, %c0_27, %c0_28] : memref<2x8x128xf32, #tpu.memory_space<vmem>>, vector<1x8x128xf32>
    %56 = vector.shape_cast %55 : vector<1x8x128xf32> to vector<8x128xf32>
    %cst_29 = arith.constant dense<0.000000e+00> : vector<8x128xf32>
    %57 = tpu.matmul %52, %51, %cst_29 {dimension_numbers = #tpu.dot_dimension_numbers<[1], [0], [0], [1], [0, 0, 1, 1], [], []>} : vector<8x32xf32>, vector<32x128xf32>, vector<8x128xf32> -> vector<8x128xf32>
    %58 = arith.addf %56, %57 : vector<8x128xf32>
    %59 = vector.extract_strided_slice %58 {offsets = [0, 0], sizes = [8, 32], strides = [1, 1]} : vector<8x128xf32> to vector<8x32xf32>
    %60 = arith.negf %59 : vector<8x32xf32>
    %61 = math.exp %60 : vector<8x32xf32>
    %cst_30 = arith.constant 1.000000e+00 : f32
    %62 = vector.broadcast %cst_30 : f32 to vector<8x32xf32>
    %63 = arith.addf %62, %61 : vector<8x32xf32>
    %64 = arith.divf %62, %63 : vector<8x32xf32>
    %65 = vector.extract_strided_slice %58 {offsets = [0, 32], sizes = [8, 32], strides = [1, 1]} : vector<8x128xf32> to vector<8x32xf32>
    %66 = arith.negf %65 : vector<8x32xf32>
    %67 = math.exp %66 : vector<8x32xf32>
    %cst_31 = arith.constant 1.000000e+00 : f32
    %68 = vector.broadcast %cst_31 : f32 to vector<8x32xf32>
    %69 = arith.addf %68, %67 : vector<8x32xf32>
    %70 = arith.divf %68, %69 : vector<8x32xf32>
    %71 = vector.extract_strided_slice %58 {offsets = [0, 64], sizes = [8, 32], strides = [1, 1]} : vector<8x128xf32> to vector<8x32xf32>
    %72 = math.tanh %71 : vector<8x32xf32>
    %73 = vector.extract_strided_slice %58 {offsets = [0, 96], sizes = [8, 32], strides = [1, 1]} : vector<8x128xf32> to vector<8x32xf32>
    %74 = arith.negf %73 : vector<8x32xf32>
    %75 = math.exp %74 : vector<8x32xf32>
    %cst_32 = arith.constant 1.000000e+00 : f32
    %76 = vector.broadcast %cst_32 : f32 to vector<8x32xf32>
    %77 = arith.addf %76, %75 : vector<8x32xf32>
    %78 = arith.divf %76, %77 : vector<8x32xf32>
    %79 = arith.mulf %70, %53 : vector<8x32xf32>
    %80 = arith.mulf %64, %72 : vector<8x32xf32>
    %81 = arith.addf %79, %80 : vector<8x32xf32>
    %82 = math.tanh %81 : vector<8x32xf32>
    %83 = arith.mulf %78, %82 : vector<8x32xf32>
    %c1_i32 = arith.constant 1 : i32
    %84 = arith.index_cast %c1_i32 : i32 to index
    %c0_33 = arith.constant 0 : index
    %c0_34 = arith.constant 0 : index
    %85 = vector.load %arg12[%84, %c0_33, %c0_34] : memref<2x8x128xf32, #tpu.memory_space<vmem>>, vector<1x8x128xf32>
    %86 = vector.shape_cast %85 : vector<1x8x128xf32> to vector<8x128xf32>
    %cst_35 = arith.constant dense<0.000000e+00> : vector<8x128xf32>
    %87 = tpu.matmul %83, %51, %cst_35 {dimension_numbers = #tpu.dot_dimension_numbers<[1], [0], [0], [1], [0, 0, 1, 1], [], []>} : vector<8x32xf32>, vector<32x128xf32>, vector<8x128xf32> -> vector<8x128xf32>
    %88 = arith.addf %86, %87 : vector<8x128xf32>
    %89 = vector.extract_strided_slice %88 {offsets = [0, 0], sizes = [8, 32], strides = [1, 1]} : vector<8x128xf32> to vector<8x32xf32>
    %90 = arith.negf %89 : vector<8x32xf32>
    %91 = math.exp %90 : vector<8x32xf32>
    %cst_36 = arith.constant 1.000000e+00 : f32
    %92 = vector.broadcast %cst_36 : f32 to vector<8x32xf32>
    %93 = arith.addf %92, %91 : vector<8x32xf32>
    %94 = arith.divf %92, %93 : vector<8x32xf32>
    %95 = vector.extract_strided_slice %88 {offsets = [0, 32], sizes = [8, 32], strides = [1, 1]} : vector<8x128xf32> to vector<8x32xf32>
    %96 = arith.negf %95 : vector<8x32xf32>
    %97 = math.exp %96 : vector<8x32xf32>
    %cst_37 = arith.constant 1.000000e+00 : f32
    %98 = vector.broadcast %cst_37 : f32 to vector<8x32xf32>
    %99 = arith.addf %98, %97 : vector<8x32xf32>
    %100 = arith.divf %98, %99 : vector<8x32xf32>
    %101 = vector.extract_strided_slice %88 {offsets = [0, 64], sizes = [8, 32], strides = [1, 1]} : vector<8x128xf32> to vector<8x32xf32>
    %102 = math.tanh %101 : vector<8x32xf32>
    %103 = vector.extract_strided_slice %88 {offsets = [0, 96], sizes = [8, 32], strides = [1, 1]} : vector<8x128xf32> to vector<8x32xf32>
    %104 = arith.negf %103 : vector<8x32xf32>
    %105 = math.exp %104 : vector<8x32xf32>
    %cst_38 = arith.constant 1.000000e+00 : f32
    %106 = vector.broadcast %cst_38 : f32 to vector<8x32xf32>
    %107 = arith.addf %106, %105 : vector<8x32xf32>
    %108 = arith.divf %106, %107 : vector<8x32xf32>
    %109 = arith.mulf %100, %81 : vector<8x32xf32>
    %110 = arith.mulf %94, %102 : vector<8x32xf32>
    %111 = arith.addf %109, %110 : vector<8x32xf32>
    %112 = math.tanh %111 : vector<8x32xf32>
    %113 = arith.mulf %108, %112 : vector<8x32xf32>
    %c2_i32 = arith.constant 2 : i32
    %c0_39 = arith.constant 0 : index
    %c0_40 = arith.constant 0 : index
    %114 = vector.load %arg9[%c0_39, %c0_40] : memref<32x128xf32, #tpu.memory_space<vmem>>, vector<32x128xf32>
    %cst_41 = arith.constant dense<0.000000e+00> : vector<8x128xf32>
    %115 = tpu.matmul %113, %114, %cst_41 {dimension_numbers = #tpu.dot_dimension_numbers<[1], [0], [0], [1], [0, 0, 1, 1], [], []>} : vector<8x32xf32>, vector<32x128xf32>, vector<8x128xf32> -> vector<8x128xf32>
    %c0_42 = arith.constant 0 : index
    %c0_43 = arith.constant 0 : index
    %116 = vector.load %arg10[%c0_42, %c0_43] : memref<1x128xf32, #tpu.memory_space<vmem>>, vector<1x128xf32>
    %117 = vector.broadcast %116 : vector<1x128xf32> to vector<8x128xf32>
    %118 = arith.addf %115, %117 : vector<8x128xf32>
    %c0_44 = arith.constant 0 : index
    %c0_45 = arith.constant 0 : index
    %119 = vector.load %arg11[%c0_44, %c0_45] : memref<8x128xf32, #tpu.memory_space<vmem>>, vector<8x128xf32>
    tpu.vector_store %arg11[%c0_44, %c0_45], %118 {strides = array<i32>} : memref<8x128xf32, #tpu.memory_space<vmem>>, vector<8x128xf32>,
    return
  }
  func.func @transform_0(%arg0: i32) -> (i32, i32, i32) {
    %c0_i32 = arith.constant 0 : i32
    %c0_i32_0 = arith.constant 0 : i32
    %c0_i32_1 = arith.constant 0 : i32
    return %c0_i32, %arg0, %c0_i32_0 : i32, i32, i32
  }
  func.func @transform_1(%arg0: i32) -> (i32, i32) {
    %c0_i32 = arith.constant 0 : i32
    %c0_i32_0 = arith.constant 0 : i32
    %c0_i32_1 = arith.constant 0 : i32
    return %c0_i32, %c0_i32_0 : i32, i32
  }
  func.func @transform_2(%arg0: i32) -> (i32, i32) {
    %c0_i32 = arith.constant 0 : i32
    %c0_i32_0 = arith.constant 0 : i32
    %c0_i32_1 = arith.constant 0 : i32
    return %c0_i32, %c0_i32_0 : i32, i32
  }
  func.func @transform_3(%arg0: i32) -> (i32, i32) {
    %c0_i32 = arith.constant 0 : i32
    %c0_i32_0 = arith.constant 0 : i32
    %c0_i32_1 = arith.constant 0 : i32
    return %c0_i32, %c0_i32_0 : i32, i32
  }
  func.func @transform_4(%arg0: i32) -> (i32, i32) {
    %c0_i32 = arith.constant 0 : i32
    %c0_i32_0 = arith.constant 0 : i32
    %c0_i32_1 = arith.constant 0 : i32
    return %c0_i32, %c0_i32_0 : i32, i32
  }
  func.func @transform_5(%arg0: i32) -> (i32, i32) {
    %c0_i32 = arith.constant 0 : i32
    %c0_i32_0 = arith.constant 0 : i32
    %c0_i32_1 = arith.constant 0 : i32
    return %c0_i32, %c0_i32_0 : i32, i32
  }
  func.func @transform_6(%arg0: i32) -> (i32, i32) {
    %c0_i32 = arith.constant 0 : i32
    %c0_i32_0 = arith.constant 0 : i32
    %c0_i32_1 = arith.constant 0 : i32
    return %c0_i32, %c0_i32_0 : i32, i32
  }
  func.func @transform_7(%arg0: i32) -> (i32, i32) {
    %c0_i32 = arith.constant 0 : i32
    %c0_i32_0 = arith.constant 0 : i32
    %c0_i32_1 = arith.constant 0 : i32
    return %c0_i32, %c0_i32_0 : i32, i32
  }
  func.func @transform_8(%arg0: i32) -> (i32, i32) {
    %c0_i32 = arith.constant 0 : i32
    %c0_i32_0 = arith.constant 0 : i32
    %c0_i32_1 = arith.constant 0 : i32
    return %c0_i32, %c0_i32_0 : i32, i32
  }
  func.func @transform_9(%arg0: i32) -> (i32, i32) {
    %c0_i32 = arith.constant 0 : i32
    %c0_i32_0 = arith.constant 0 : i32
    %c0_i32_1 = arith.constant 0 : i32
    return %c0_i32, %c0_i32_0 : i32, i32
  }
  func.func @transform_10(%arg0: i32) -> (i32, i32) {
    %c0_i32 = arith.constant 0 : i32
    %c0_i32_0 = arith.constant 0 : i32
    return %arg0, %c0_i32 : i32, i32
  }
}

</mosaic_0001>

<llo_original>
// kernel: cnn_lstm_forward.1
$region0: #{cnn_lstm_forward.1}
  #allocation0 [shape = 'u32[]', space=smem, size = 0x4, offset = 0x4, fixed_abs, tag = 'smem constant byte address 0x4 - core index']
  #allocation1 [shape = 'u32[144,128]{1,0:T(1,128)}', space=vmem, size = 0x12000, scoped, tag = 'internal scratch']
  #allocation2 [shape = 'f32[2,8,128]{2,1,0:T(8,128)}', space=vmem, size = 0x2000, scoped, tag = 'scratch operand']
  %s0 = inlined_call_operand.vmem [shape: f32[8,8,16], index: 0, kind: input, shape index: {}]
  %s1 = inlined_call_operand.vmem [shape: f32[48,8], index: 1, kind: input, shape index: {}]
  %s2 = inlined_call_operand.vmem [shape: f32[1,8], index: 2, kind: input, shape index: {}]
  %s3 = inlined_call_operand.vmem [shape: f32[24,16], index: 3, kind: input, shape index: {}]
  %s4 = inlined_call_operand.vmem [shape: f32[1,16], index: 4, kind: input, shape index: {}]
  %s5 = inlined_call_operand.vmem [shape: f32[16,128], index: 5, kind: input, shape index: {}]
  %s6 = inlined_call_operand.vmem [shape: f32[32,128], index: 6, kind: input, shape index: {}]
  %s7 = inlined_call_operand.vmem [shape: f32[1,128], index: 7, kind: input, shape index: {}]
  %s8 = inlined_call_operand.vmem [shape: f32[32,128], index: 8, kind: input, shape index: {}]
  %s9 = inlined_call_operand.vmem [shape: f32[1,128], index: 9, kind: input, shape index: {}]
  %s10 = inlined_call_operand.vmem [shape: f32[8,128], index: 10, kind: output, shape index: {}]
  %s11 = sld [smem:[#allocation0]]
  $region50: #{cnn_lstm_forward.1} parent=0
    _
  %s13 = ssub.s32 1, %s11
  %s14 = scalar_select 0, %s13, %s11
  // Predicated region
  $region2: #{cnn_lstm_forward.1} parent=0 // pred_check
    _
  $region3: #{cnn_lstm_forward.1} parent=0 // pred_check_branch
    %16 = sbr.rel (0) target = $region5
  $region4: #{cnn_lstm_forward.1} parent=0 // pred_region
    _
  $region5: #{cnn_lstm_forward.1} parent=0 // pred_fallthru
    _
  // Predicated region
  $region6: #{cnn_lstm_forward.1} parent=0 // pred_check
    _
  $region7: #{cnn_lstm_forward.1} parent=0 // pred_check_branch
    %18 = sbr.rel (0) target = $region9
  $region8: #{cnn_lstm_forward.1} parent=0 // pred_region
    _
  $region9: #{cnn_lstm_forward.1} parent=0 // pred_fallthru
    _
  // Predicated region
  $region10: #{cnn_lstm_forward.1} parent=0 // pred_check
    _
  $region11: #{cnn_lstm_forward.1} parent=0 // pred_check_branch
    %20 = sbr.rel (0) target = $region13
  $region12: #{cnn_lstm_forward.1} parent=0 // pred_region
    _
  $region13: #{cnn_lstm_forward.1} parent=0 // pred_fallthru
    _
  // Predicated region
  $region14: #{cnn_lstm_forward.1} parent=0 // pred_check
    _
  $region15: #{cnn_lstm_forward.1} parent=0 // pred_check_branch
    %22 = sbr.rel (0) target = $region17
  $region16: #{cnn_lstm_forward.1} parent=0 // pred_region
    _
  $region17: #{cnn_lstm_forward.1} parent=0 // pred_fallthru
    _
  // Predicated region
  $region18: #{cnn_lstm_forward.1} parent=0 // pred_check
    _
  $region19: #{cnn_lstm_forward.1} parent=0 // pred_check_branch
    %24 = sbr.rel (0) target = $region21
  $region20: #{cnn_lstm_forward.1} parent=0 // pred_region
    _
  $region21: #{cnn_lstm_forward.1} parent=0 // pred_fallthru
    _
  // Predicated region
  $region22: #{cnn_lstm_forward.1} parent=0 // pred_check
    _
  $region23: #{cnn_lstm_forward.1} parent=0 // pred_check_branch
    %26 = sbr.rel (0) target = $region25
  $region24: #{cnn_lstm_forward.1} parent=0 // pred_region
    _
  $region25: #{cnn_lstm_forward.1} parent=0 // pred_fallthru
    _
  // Predicated region
  $region26: #{cnn_lstm_forward.1} parent=0 // pred_check
    _
  $region27: #{cnn_lstm_forward.1} parent=0 // pred_check_branch
    %28 = sbr.rel (0) target = $region29
  $region28: #{cnn_lstm_forward.1} parent=0 // pred_region
    _
  $region29: #{cnn_lstm_forward.1} parent=0 // pred_fallthru
    _
  // Predicated region
  $region30: #{cnn_lstm_forward.1} parent=0 // pred_check
    _
  $region31: #{cnn_lstm_forward.1} parent=0 // pred_check_branch
    %30 = sbr.rel (0) target = $region33
  $region32: #{cnn_lstm_forward.1} parent=0 // pred_region
    _
  $region33: #{cnn_lstm_forward.1} parent=0 // pred_fallthru
    _
  // Predicated region
  $region34: #{cnn_lstm_forward.1} parent=0 // pred_check
    _
  $region35: #{cnn_lstm_forward.1} parent=0 // pred_check_branch
    %32 = sbr.rel (0) target = $region37
  $region36: #{cnn_lstm_forward.1} parent=0 // pred_region
    _
  $region37: #{cnn_lstm_forward.1} parent=0 // pred_fallthru
    _
  // Predicated region
  $region38: #{cnn_lstm_forward.1} parent=0 // pred_check
    _
  $region39: #{cnn_lstm_forward.1} parent=0 // pred_check_branch
    %34 = sbr.rel (0) target = $region41
  $region40: #{cnn_lstm_forward.1} parent=0 // pred_region
    _
  $region41: #{cnn_lstm_forward.1} parent=0 // pred_fallthru
    _
  %v35 = vld [vmem:[%s0] sm:$0xff]
  %v36 = vld [vmem:[%s0 + $0x8] sm:$0xff]
  %v37 = vld [vmem:[%s0 + $0x10] sm:$0xff]
  %v38 = vld [vmem:[%s0 + $0x18] sm:$0xff]
  %v39 = vld [vmem:[%s0 + $0x20] sm:$0xff]
  %v40 = vld [vmem:[%s0 + $0x28] sm:$0xff]
  %v41 = vld [vmem:[%s0 + $0x30] sm:$0xff]
  %v42 = vld [vmem:[%s0 + $0x38] sm:$0xff]
  %v43 = vld [vmem:[%s1] sm:$0xff]
  %v44 = vld [vmem:[%s1 + $0x8] sm:$0xff]
  %v45 = vld [vmem:[%s1 + $0x10] sm:$0xff]
  %v46 = vld [vmem:[%s1 + $0x18] sm:$0xff]
  %v47 = vld [vmem:[%s1 + $0x20] sm:$0xff]
  %v48 = vld [vmem:[%s1 + $0x28] sm:$0xff]
  %57 = vrot.lane.b32.xlu0 %v35, 16
  %v58 = vpop.permute.xlu0 %57
  %59 = vrot.lane.b32.xlu0 %v36, 16
  %v60 = vpop.permute.xlu0 %59
  %61 = vrot.lane.b32.xlu0 %v37, 16
  %v62 = vpop.permute.xlu0 %61
  %63 = vrot.lane.b32.xlu0 %v38, 16
  %v64 = vpop.permute.xlu0 %63
  %65 = vrot.lane.b32.xlu0 %v39, 16
  %v66 = vpop.permute.xlu0 %65
  %67 = vrot.lane.b32.xlu0 %v40, 16
  %v68 = vpop.permute.xlu0 %67
  %69 = vrot.lane.b32.xlu0 %v41, 16
  %v70 = vpop.permute.xlu0 %69
  %71 = vrot.lane.b32.xlu0 %v42, 16
  %v72 = vpop.permute.xlu0 %71
  %82 = vrot.lane.b32.xlu0 %v36, 32
  %v83 = vpop.permute.xlu0 %82
  %84 = vrot.lane.b32.xlu0 %v37, 32
  %v85 = vpop.permute.xlu0 %84
  %86 = vrot.lane.b32.xlu0 %v38, 32
  %v87 = vpop.permute.xlu0 %86
  %88 = vrot.lane.b32.xlu0 %v39, 32
  %v89 = vpop.permute.xlu0 %88
  %90 = vrot.lane.b32.xlu0 %v40, 32
  %v91 = vpop.permute.xlu0 %90
  %92 = vrot.lane.b32.xlu0 %v41, 32
  %v93 = vpop.permute.xlu0 %92
  %94 = vrot.lane.b32.xlu0 %v42, 32
  %v95 = vpop.permute.xlu0 %94
  %96 = vrot.lane.b32.xlu0 0.0, 32
  %v97 = vpop.permute.xlu0 %96
  %vm106 = vcmask 130048
  %v107 = vsel %vm106, 0.0, %v58
  %v108 = vsel %vm106, %v35, %v60
  %v109 = vsel %vm106, %v36, %v62
  %v110 = vsel %vm106, %v37, %v64
  %v111 = vsel %vm106, %v38, %v66
  %v112 = vsel %vm106, %v39, %v68
  %v113 = vsel %vm106, %v40, %v70
  %v114 = vsel %vm106, %v41, %v72
  %vm115 = vcmask 261120
  %v116 = vsel %vm115, %v107, %v83
  %v117 = vsel %vm115, %v108, %v85
  %v118 = vsel %vm115, %v109, %v87
  %v119 = vsel %vm115, %v110, %v89
  %v120 = vsel %vm115, %v111, %v91
  %v121 = vsel %vm115, %v112, %v93
  %v122 = vsel %vm115, %v113, %v95
  %v123 = vsel %vm115, %v114, %v97
  %v124 = vld [vmem:[%s2] sm:$0x1]
  %v126 = vlaneseq
  %v127 = vshrl.u32 %v126, 7
  %v128 = vsub.s32 0, %v127
  %v129 = vrot.slane %v124, %v128
  %vm131 = vcmask 392192
  %v133 = vsel %vm131, %v116, 0
  %v136 = vsel %vm131, %v117, 0
  %v139 = vsel %vm131, %v118, 0
  %v142 = vsel %vm131, %v119, 0
  %v145 = vsel %vm131, %v120, 0
  %v148 = vsel %vm131, %v121, 0
  %v151 = vsel %vm131, %v122, 0
  %v154 = vsel %vm131, %v123, 0
  %156 = vmatprep.subr.mxu0 0.0
  %157 = vmatpush1.msra.mxu0 %v43
  %158 = vmatprep.subr.mxu0 0.0
  %159 = vmatpush1.msra.mxu0 %v44
  %160 = vmatprep.subr.mxu0 0.0
  %161 = vmatpush1.msra.mxu0 %v45
  %162 = vmatprep.subr.mxu0 0.0
  %163 = vmatpush1.msra.mxu0 %v46
  %164 = vmatprep.subr.mxu0 0.0
  %165 = vmatpush1.msra.mxu0 %v47
  %166 = vmatprep.subr.mxu0 0.0
  %167 = vmatpush1.msra.mxu0 %v48
  %168 = vmatprep.subr.mxu0 0.0
  %169 = vmatpush1.msra.mxu0 0.0
  %170 = vmatprep.subr.mxu0 0.0
  %171 = vmatpush1.msra.mxu0 0.0
  %172 = vmatprep.subr.mxu0 0.0
  %173 = vmatpush1.msra.mxu0 0.0
  %174 = vmatprep.subr.mxu0 0.0
  %175 = vmatpush1.msra.mxu0 0.0
  %176 = vmatprep.subr.mxu0 0.0
  %177 = vmatpush1.msra.mxu0 0.0
  %178 = vmatprep.subr.mxu0 0.0
  %179 = vmatpush1.msra.mxu0 0.0
  %180 = vmatprep.subr.mxu0 0.0
  %181 = vmatpush1.msra.mxu0 0.0
  %182 = vmatprep.subr.mxu0 0.0
  %183 = vmatpush1.msra.mxu0 0.0
  %184 = vmatprep.subr.mxu0 0.0
  %185 = vmatpush1.msra.mxu0 0.0
  %186 = vmatprep.subr.mxu0 0.0
  %187 = vmatpush1.msra.mxu0 0.0
  %188 = vmatprep.subr.mxu0 0.0
  %189 = vmatpush1.msra.mxu0 0.0
  %190 = vmatprep.subr.mxu0 0.0
  %191 = vmatpush1.msra.mxu0 0.0
  %192 = vmatprep.subr.mxu0 0.0
  %193 = vmatpush1.msra.mxu0 0.0
  %194 = vmatprep.subr.mxu0 0.0
  %195 = vmatpush1.msra.mxu0 0.0
  %196 = vmatprep.subr.mxu0 0.0
  %197 = vmatpush1.msra.mxu0 0.0
  %198 = vmatprep.subr.mxu0 0.0
  %199 = vmatpush1.msra.mxu0 0.0
  %200 = vmatprep.subr.mxu0 0.0
  %201 = vmatpush1.msra.mxu0 0.0
  %202 = vmatprep.subr.mxu0 0.0
  %203 = vmatpush1.msra.mxu0 0.0
  %204 = vmatprep.subr.mxu0 0.0
  %205 = vmatpush1.msra.mxu0 0.0
  %206 = vmatprep.subr.mxu0 0.0
  %207 = vmatpush1.msra.mxu0 0.0
  %208 = vmatprep.subr.mxu0 0.0
  %209 = vmatpush1.msra.mxu0 0.0
  %210 = vmatprep.subr.mxu0 0.0
  %211 = vmatpush1.msra.mxu0 0.0
  %212 = vmatprep.subr.mxu0 0.0
  %213 = vmatpush1.msra.mxu0 0.0
  %214 = vmatprep.subr.mxu0 0.0
  %215 = vmatpush1.msra.mxu0 0.0
  %216 = vmatprep.subr.mxu0 0.0
  %217 = vmatpush1.msra.mxu0 0.0
  %218 = vmatprep.subr.mxu0 0.0
  %219 = vmatpush1.msra.mxu0 0.0
  %220 = vmatprep.mubr.f32.mxu0 0.0
  %221 = vmatmul.mubr.f32.gmra.mrb[0].mxu0 %v133
  %v222 = vpop.f32.mrb[0].mxu0
  %v223 = vadd.f32 %v129, %v222
  %v224 = vpop.f32.mrb[0].mxu0
  %225 = vmatprep.mubr.f32.mxu0 0.0
  %226 = vmatmul.mubr.f32.gmra.mrb[0].mxu0 %v136
  %v227 = vpop.f32.mrb[0].mxu0
  %v228 = vadd.f32 %v129, %v227
  %v229 = vpop.f32.mrb[0].mxu0
  %230 = vmatprep.mubr.f32.mxu0 0.0
  %231 = vmatmul.mubr.f32.gmra.mrb[0].mxu0 %v139
  %v232 = vpop.f32.mrb[0].mxu0
  %v233 = vadd.f32 %v129, %v232
  %v234 = vpop.f32.mrb[0].mxu0
  %235 = vmatprep.mubr.f32.mxu0 0.0
  %236 = vmatmul.mubr.f32.gmra.mrb[0].mxu0 %v142
  %v237 = vpop.f32.mrb[0].mxu0
  %v238 = vadd.f32 %v129, %v237
  %v239 = vpop.f32.mrb[0].mxu0
  %240 = vmatprep.mubr.f32.mxu0 0.0
  %241 = vmatmul.mubr.f32.gmra.mrb[0].mxu0 %v145
  %v242 = vpop.f32.mrb[0].mxu0
  %v243 = vadd.f32 %v129, %v242
  %v244 = vpop.f32.mrb[0].mxu0
  %245 = vmatprep.mubr.f32.mxu0 0.0
  %246 = vmatmul.mubr.f32.gmra.mrb[0].mxu0 %v148
  %v247 = vpop.f32.mrb[0].mxu0
  %v248 = vadd.f32 %v129, %v247
  %v249 = vpop.f32.mrb[0].mxu0
  %250 = vmatprep.mubr.f32.mxu0 0.0
  %251 = vmatmul.mubr.f32.gmra.mrb[0].mxu0 %v151
  %v252 = vpop.f32.mrb[0].mxu0
  %v253 = vadd.f32 %v129, %v252
  %v254 = vpop.f32.mrb[0].mxu0
  %255 = vmatprep.mubr.f32.mxu0 0.0
  %256 = vmatmul.mubr.f32.gmra.mrb[0].mxu0 %v154
  %v257 = vpop.f32.mrb[0].mxu0
  %v258 = vadd.f32 %v129, %v257
  %v259 = vpop.f32.mrb[0].mxu0
  %260 = vdwg.mxu0
  %v261 = vmax.f32 %v223, 0.0
  %v262 = vmax.f32 %v228, 0.0
  %v263 = vmax.f32 %v233, 0.0
  %v264 = vmax.f32 %v238, 0.0
  %v265 = vmax.f32 %v243, 0.0
  %v266 = vmax.f32 %v248, 0.0
  %v267 = vmax.f32 %v253, 0.0
  %v268 = vmax.f32 %v258, 0.0
  %v269 = vmax.f32 %v261, %v262
  %v270 = vmax.f32 %v263, %v264
  %v271 = vmax.f32 %v265, %v266
  %v272 = vmax.f32 %v267, %v268
  %v273 = vld [vmem:[%s3] sm:$0xff]
  %v274 = vld [vmem:[%s3 + $0x8] sm:$0xff]
  %v275 = vld [vmem:[%s3 + $0x10] sm:$0xff]
  %280 = vrot.lane.b32.xlu0 %v269, 8
  %v281 = vpop.permute.xlu0 %280
  %282 = vrot.lane.b32.xlu0 %v270, 8
  %v283 = vpop.permute.xlu0 %282
  %284 = vrot.lane.b32.xlu0 %v271, 8
  %v285 = vpop.permute.xlu0 %284
  %286 = vrot.lane.b32.xlu0 %v272, 8
  %v287 = vpop.permute.xlu0 %286
  %292 = vrot.lane.b32.xlu0 %v270, 16
  %v293 = vpop.permute.xlu0 %292
  %294 = vrot.lane.b32.xlu0 %v271, 16
  %v295 = vpop.permute.xlu0 %294
  %296 = vrot.lane.b32.xlu0 %v272, 16
  %v297 = vpop.permute.xlu0 %296
  %298 = vrot.lane.b32.xlu0 0.0, 16
  %v299 = vpop.permute.xlu0 %298
  %vm304 = vcmask 64512
  %v305 = vsel %vm304, 0.0, %v281
  %v306 = vsel %vm304, %v269, %v283
  %v307 = vsel %vm304, %v270, %v285
  %v308 = vsel %vm304, %v271, %v287
  %v309 = vsel %vm106, %v305, %v293
  %v310 = vsel %vm106, %v306, %v295
  %v311 = vsel %vm106, %v307, %v297
  %v312 = vsel %vm106, %v308, %v299
  %v313 = vld [vmem:[%s4] sm:$0x1]
  %v315 = vlaneseq
  %v316 = vshrl.u32 %v315, 7
  %v317 = vsub.s32 0, %v316
  %v318 = vrot.slane %v313, %v317
  %vm320 = vcmask 195584
  %v322 = vsel %vm320, %v309, 0
  %v325 = vsel %vm320, %v310, 0
  %v328 = vsel %vm320, %v311, 0
  %v331 = vsel %vm320, %v312, 0
  %333 = vmatprep.subr.mxu0 0.0
  %334 = vmatpush1.msra.mxu0 %v273
  %335 = vmatprep.subr.mxu0 0.0
  %336 = vmatpush1.msra.mxu0 %v274
  %337 = vmatprep.subr.mxu0 0.0
  %338 = vmatpush1.msra.mxu0 %v275
  %339 = vmatprep.subr.mxu0 0.0
  %340 = vmatpush1.msra.mxu0 0.0
  %341 = vmatprep.subr.mxu0 0.0
  %342 = vmatpush1.msra.mxu0 0.0
  %343 = vmatprep.subr.mxu0 0.0
  %344 = vmatpush1.msra.mxu0 0.0
  %345 = vmatprep.subr.mxu0 0.0
  %346 = vmatpush1.msra.mxu0 0.0
  %347 = vmatprep.subr.mxu0 0.0
  %348 = vmatpush1.msra.mxu0 0.0
  %349 = vmatprep.subr.mxu0 0.0
  %350 = vmatpush1.msra.mxu0 0.0
  %351 = vmatprep.subr.mxu0 0.0
  %352 = vmatpush1.msra.mxu0 0.0
  %353 = vmatprep.subr.mxu0 0.0
  %354 = vmatpush1.msra.mxu0 0.0
  %355 = vmatprep.subr.mxu0 0.0
  %356 = vmatpush1.msra.mxu0 0.0
  %357 = vmatprep.subr.mxu0 0.0
  %358 = vmatpush1.msra.mxu0 0.0
  %359 = vmatprep.subr.mxu0 0.0
  %360 = vmatpush1.msra.mxu0 0.0
  %361 = vmatprep.subr.mxu0 0.0
  %362 = vmatpush1.msra.mxu0 0.0
  %363 = vmatprep.subr.mxu0 0.0
  %364 = vmatpush1.msra.mxu0 0.0
  %365 = vmatprep.subr.mxu0 0.0
  %366 = vmatpush1.msra.mxu0 0.0
  %367 = vmatprep.subr.mxu0 0.0
  %368 = vmatpush1.msra.mxu0 0.0
  %369 = vmatprep.subr.mxu0 0.0
  %370 = vmatpush1.msra.mxu0 0.0
  %371 = vmatprep.subr.mxu0 0.0
  %372 = vmatpush1.msra.mxu0 0.0
  %373 = vmatprep.subr.mxu0 0.0
  %374 = vmatpush1.msra.mxu0 0.0
  %375 = vmatprep.subr.mxu0 0.0
  %376 = vmatpush1.msra.mxu0 0.0
  %377 = vmatprep.subr.mxu0 0.0
  %378 = vmatpush1.msra.mxu0 0.0
  %379 = vmatprep.subr.mxu0 0.0
  %380 = vmatpush1.msra.mxu0 0.0
  %381 = vmatprep.subr.mxu0 0.0
  %382 = vmatpush1.msra.mxu0 0.0
  %383 = vmatprep.subr.mxu0 0.0
  %384 = vmatpush1.msra.mxu0 0.0
  %385 = vmatprep.subr.mxu0 0.0
  %386 = vmatpush1.msra.mxu0 0.0
  %387 = vmatprep.subr.mxu0 0.0
  %388 = vmatpush1.msra.mxu0 0.0
  %389 = vmatprep.subr.mxu0 0.0
  %390 = vmatpush1.msra.mxu0 0.0
  %391 = vmatprep.subr.mxu0 0.0
  %392 = vmatpush1.msra.mxu0 0.0
  %393 = vmatprep.subr.mxu0 0.0
  %394 = vmatpush1.msra.mxu0 0.0
  %395 = vmatprep.subr.mxu0 0.0
  %396 = vmatpush1.msra.mxu0 0.0
  %397 = vmatprep.mubr.f32.mxu0 0.0
  %398 = vmatmul.mubr.f32.gmra.mrb[0].mxu0 %v322
  %v399 = vpop.f32.mrb[0].mxu0
  %v400 = vadd.f32 %v318, %v399
  %v401 = vpop.f32.mrb[0].mxu0
  %402 = vmatprep.mubr.f32.mxu0 0.0
  %403 = vmatmul.mubr.f32.gmra.mrb[0].mxu0 %v325
  %v404 = vpop.f32.mrb[0].mxu0
  %v405 = vadd.f32 %v318, %v404
  %v406 = vpop.f32.mrb[0].mxu0
  %407 = vmatprep.mubr.f32.mxu0 0.0
  %408 = vmatmul.mubr.f32.gmra.mrb[0].mxu0 %v328
  %v409 = vpop.f32.mrb[0].mxu0
  %v410 = vadd.f32 %v318, %v409
  %v411 = vpop.f32.mrb[0].mxu0
  %412 = vmatprep.mubr.f32.mxu0 0.0
  %413 = vmatmul.mubr.f32.gmra.mrb[0].mxu0 %v331
  %v414 = vpop.f32.mrb[0].mxu0
  %v415 = vadd.f32 %v318, %v414
  %v416 = vpop.f32.mrb[0].mxu0
  %417 = vdwg.mxu0
  %v418 = vmax.f32 %v400, 0.0
  %v419 = vmax.f32 %v405, 0.0
  %v420 = vmax.f32 %v410, 0.0
  %v421 = vmax.f32 %v415, 0.0
  %v422 = vmax.f32 %v418, %v419
  %v423 = vmax.f32 %v420, %v421
  %v424 = vld [vmem:[%s5] sm:$0xff]
  %v425 = vld [vmem:[%s5 + $0x8] sm:$0xff]
  %v426 = vld [vmem:[%s7] sm:$0x1]
  %v428 = vlaneseq
  %v429 = vshrl.u32 %v428, 7
  %v430 = vsub.s32 0, %v429
  %v431 = vrot.slane %v426, %v430
  %v434 = vsel %vm106, %v422, 0
  %v437 = vsel %vm106, %v423, 0
  %439 = vmatprep.subr.mxu0 0.0
  %440 = vmatpush1.msra.mxu0 %v424
  %441 = vmatprep.subr.mxu0 0.0
  %442 = vmatpush1.msra.mxu0 %v425
  %443 = vmatprep.subr.mxu0 0.0
  %444 = vmatpush1.msra.mxu0 0.0
  %445 = vmatprep.subr.mxu0 0.0
  %446 = vmatpush1.msra.mxu0 0.0
  %447 = vmatprep.subr.mxu0 0.0
  %448 = vmatpush1.msra.mxu0 0.0
  %449 = vmatprep.subr.mxu0 0.0
  %450 = vmatpush1.msra.mxu0 0.0
  %451 = vmatprep.subr.mxu0 0.0
  %452 = vmatpush1.msra.mxu0 0.0
  %453 = vmatprep.subr.mxu0 0.0
  %454 = vmatpush1.msra.mxu0 0.0
  %455 = vmatprep.subr.mxu0 0.0
  %456 = vmatpush1.msra.mxu0 0.0
  %457 = vmatprep.subr.mxu0 0.0
  %458 = vmatpush1.msra.mxu0 0.0
  %459 = vmatprep.subr.mxu0 0.0
  %460 = vmatpush1.msra.mxu0 0.0
  %461 = vmatprep.subr.mxu0 0.0
  %462 = vmatpush1.msra.mxu0 0.0
  %463 = vmatprep.subr.mxu0 0.0
  %464 = vmatpush1.msra.mxu0 0.0
  %465 = vmatprep.subr.mxu0 0.0
  %466 = vmatpush1.msra.mxu0 0.0
  %467 = vmatprep.subr.mxu0 0.0
  %468 = vmatpush1.msra.mxu0 0.0
  %469 = vmatprep.subr.mxu0 0.0
  %470 = vmatpush1.msra.mxu0 0.0
  %471 = vmatprep.subr.mxu0 0.0
  %472 = vmatpush1.msra.mxu0 0.0
  %473 = vmatprep.subr.mxu0 0.0
  %474 = vmatpush1.msra.mxu0 0.0
  %475 = vmatprep.subr.mxu0 0.0
  %476 = vmatpush1.msra.mxu0 0.0
  %477 = vmatprep.subr.mxu0 0.0
  %478 = vmatpush1.msra.mxu0 0.0
  %479 = vmatprep.subr.mxu0 0.0
  %480 = vmatpush1.msra.mxu0 0.0
  %481 = vmatprep.subr.mxu0 0.0
  %482 = vmatpush1.msra.mxu0 0.0
  %483 = vmatprep.subr.mxu0 0.0
  %484 = vmatpush1.msra.mxu0 0.0
  %485 = vmatprep.subr.mxu0 0.0
  %486 = vmatpush1.msra.mxu0 0.0
  %487 = vmatprep.subr.mxu0 0.0
  %488 = vmatpush1.msra.mxu0 0.0
  %489 = vmatprep.subr.mxu0 0.0
  %490 = vmatpush1.msra.mxu0 0.0
  %491 = vmatprep.subr.mxu0 0.0
  %492 = vmatpush1.msra.mxu0 0.0
  %493 = vmatprep.subr.mxu0 0.0
  %494 = vmatpush1.msra.mxu0 0.0
  %495 = vmatprep.subr.mxu0 0.0
  %496 = vmatpush1.msra.mxu0 0.0
  %497 = vmatprep.subr.mxu0 0.0
  %498 = vmatpush1.msra.mxu0 0.0
  %499 = vmatprep.subr.mxu0 0.0
  %500 = vmatpush1.msra.mxu0 0.0
  %501 = vmatprep.subr.mxu0 0.0
  %502 = vmatpush1.msra.mxu0 0.0
  %503 = vmatprep.mubr.f32.mxu0 0.0
  %504 = vmatmul.mubr.f32.gmra.mrb[0].mxu0 %v434
  %v505 = vpop.f32.mrb[0].mxu0
  %v506 = vadd.f32 %v431, %v505
  %v507 = vpop.f32.mrb[0].mxu0
  %508 = vmatprep.mubr.f32.mxu0 0.0
  %509 = vmatmul.mubr.f32.gmra.mrb[0].mxu0 %v437
  %v510 = vpop.f32.mrb[0].mxu0
  %v511 = vadd.f32 %v431, %v510
  %v512 = vpop.f32.mrb[0].mxu0
  %513 = vdwg.mxu0
  %514 = vst [vmem:[#allocation2] sm:$0xff] %v506
  %515 = vst [vmem:[#allocation2 + $0x8] sm:$0xff] %v511
  %v516 = vld [vmem:[%s6] sm:$0xff]
  %v517 = vld [vmem:[%s6 + $0x8] sm:$0xff]
  %v518 = vld [vmem:[%s6 + $0x10] sm:$0xff]
  %v519 = vld [vmem:[%s6 + $0x18] sm:$0xff]
  %v520 = vld [vmem:[#allocation2] sm:$0xff]
  %v521 = vsel %vm115, 0.0, 0
  %523 = vmatprep.subr.mxu0 0.0
  %524 = vmatpush1.msra.mxu0 %v516
  %525 = vmatprep.subr.mxu0 0.0
  %526 = vmatpush1.msra.mxu0 %v517
  %527 = vmatprep.subr.mxu0 0.0
  %528 = vmatpush1.msra.mxu0 %v518
  %529 = vmatprep.subr.mxu0 0.0
  %530 = vmatpush1.msra.mxu0 %v519
  %531 = vmatprep.subr.mxu0 0.0
  %532 = vmatpush1.msra.mxu0 0.0
  %533 = vmatprep.subr.mxu0 0.0
  %534 = vmatpush1.msra.mxu0 0.0
  %535 = vmatprep.subr.mxu0 0.0
  %536 = vmatpush1.msra.mxu0 0.0
  %537 = vmatprep.subr.mxu0 0.0
  %538 = vmatpush1.msra.mxu0 0.0
  %539 = vmatprep.subr.mxu0 0.0
  %540 = vmatpush1.msra.mxu0 0.0
  %541 = vmatprep.subr.mxu0 0.0
  %542 = vmatpush1.msra.mxu0 0.0
  %543 = vmatprep.subr.mxu0 0.0
  %544 = vmatpush1.msra.mxu0 0.0
  %545 = vmatprep.subr.mxu0 0.0
  %546 = vmatpush1.msra.mxu0 0.0
  %547 = vmatprep.subr.mxu0 0.0
  %548 = vmatpush1.msra.mxu0 0.0
  %549 = vmatprep.subr.mxu0 0.0
  %550 = vmatpush1.msra.mxu0 0.0
  %551 = vmatprep.subr.mxu0 0.0
  %552 = vmatpush1.msra.mxu0 0.0
  %553 = vmatprep.subr.mxu0 0.0
  %554 = vmatpush1.msra.mxu0 0.0
  %555 = vmatprep.subr.mxu0 0.0
  %556 = vmatpush1.msra.mxu0 0.0
  %557 = vmatprep.subr.mxu0 0.0
  %558 = vmatpush1.msra.mxu0 0.0
  %559 = vmatprep.subr.mxu0 0.0
  %560 = vmatpush1.msra.mxu0 0.0
  %561 = vmatprep.subr.mxu0 0.0
  %562 = vmatpush1.msra.mxu0 0.0
  %563 = vmatprep.subr.mxu0 0.0
  %564 = vmatpush1.msra.mxu0 0.0
  %565 = vmatprep.subr.mxu0 0.0
  %566 = vmatpush1.msra.mxu0 0.0
  %567 = vmatprep.subr.mxu0 0.0
  %568 = vmatpush1.msra.mxu0 0.0
  %569 = vmatprep.subr.mxu0 0.0
  %570 = vmatpush1.msra.mxu0 0.0
  %571 = vmatprep.subr.mxu0 0.0
  %572 = vmatpush1.msra.mxu0 0.0
  %573 = vmatprep.subr.mxu0 0.0
  %574 = vmatpush1.msra.mxu0 0.0
  %575 = vmatprep.subr.mxu0 0.0
  %576 = vmatpush1.msra.mxu0 0.0
  %577 = vmatprep.subr.mxu0 0.0
  %578 = vmatpush1.msra.mxu0 0.0
  %579 = vmatprep.subr.mxu0 0.0
  %580 = vmatpush1.msra.mxu0 0.0
  %581 = vmatprep.subr.mxu0 0.0
  %582 = vmatpush1.msra.mxu0 0.0
  %583 = vmatprep.subr.mxu0 0.0
  %584 = vmatpush1.msra.mxu0 0.0
  %585 = vmatprep.subr.mxu0 0.0
  %586 = vmatpush1.msra.mxu0 0.0
  %587 = vmatprep.mubr.f32.mxu0 0.0
  %588 = vmatmul.mubr.f32.gmra.mrb[0].mxu0 %v521
  %v589 = vpop.f32.mrb[0].mxu0
  %v590 = vadd.f32 0.0, %v589
  %v591 = vpop.f32.mrb[0].mxu0
  %592 = vdwg.mxu0
  %v593 = vadd.f32 %v520, %v590
  %v594 = vxor.u32 %v593, 2147483648
  %v595 = vmul.f32 %v594, 1.442695
  %v596 = vpow.pop %v595
  %v597 = vadd.f32 %v596, 1.0
  %v598 = vrcp.pop %v597
  %v599 = vmul.f32 1.0, %v598
  %v600 = vtanh.pop %v593
  %v601 = vmul.f32 %v599, 0.0
  %603 = vrot.lane.b32.xlu0 %v600, 64
  %v604 = vpop.permute.xlu0 %603
  %v606 = vmul.f32 %v599, %v604
  %608 = vrot.lane.b32.xlu0 %v606, 32
  %v609 = vpop.permute.xlu0 %608
  %v611 = vadd.f32 %v601, %v609
  %v612 = vtanh.pop %v611
  %614 = vrot.lane.b32.xlu0 %v612, 64
  %v615 = vpop.permute.xlu0 %614
  %v617 = vmul.f32 %v599, %v615
  %s618 = scalar_lea.vmem [#allocation2], 8
  %v619 = vld [vmem:[%s618] sm:$0xff]
  %621 = vrot.lane.b32.xlu0 %v617, 32
  %v622 = vpop.permute.xlu0 %621
  %v623 = vsel %vm115, %v622, 0
  %625 = vmatprep.subr.mxu0 0.0
  %626 = vmatpush1.msra.mxu0 %v516
  %627 = vmatprep.subr.mxu0 0.0
  %628 = vmatpush1.msra.mxu0 %v517
  %629 = vmatprep.subr.mxu0 0.0
  %630 = vmatpush1.msra.mxu0 %v518
  %631 = vmatprep.subr.mxu0 0.0
  %632 = vmatpush1.msra.mxu0 %v519
  %633 = vmatprep.subr.mxu0 0.0
  %634 = vmatpush1.msra.mxu0 0.0
  %635 = vmatprep.subr.mxu0 0.0
  %636 = vmatpush1.msra.mxu0 0.0
  %637 = vmatprep.subr.mxu0 0.0
  %638 = vmatpush1.msra.mxu0 0.0
  %639 = vmatprep.subr.mxu0 0.0
  %640 = vmatpush1.msra.mxu0 0.0
  %641 = vmatprep.subr.mxu0 0.0
  %642 = vmatpush1.msra.mxu0 0.0
  %643 = vmatprep.subr.mxu0 0.0
  %644 = vmatpush1.msra.mxu0 0.0
  %645 = vmatprep.subr.mxu0 0.0
  %646 = vmatpush1.msra.mxu0 0.0
  %647 = vmatprep.subr.mxu0 0.0
  %648 = vmatpush1.msra.mxu0 0.0
  %649 = vmatprep.subr.mxu0 0.0
  %650 = vmatpush1.msra.mxu0 0.0
  %651 = vmatprep.subr.mxu0 0.0
  %652 = vmatpush1.msra.mxu0 0.0
  %653 = vmatprep.subr.mxu0 0.0
  %654 = vmatpush1.msra.mxu0 0.0
  %655 = vmatprep.subr.mxu0 0.0
  %656 = vmatpush1.msra.mxu0 0.0
  %657 = vmatprep.subr.mxu0 0.0
  %658 = vmatpush1.msra.mxu0 0.0
  %659 = vmatprep.subr.mxu0 0.0
  %660 = vmatpush1.msra.mxu0 0.0
  %661 = vmatprep.subr.mxu0 0.0
  %662 = vmatpush1.msra.mxu0 0.0
  %663 = vmatprep.subr.mxu0 0.0
  %664 = vmatpush1.msra.mxu0 0.0
  %665 = vmatprep.subr.mxu0 0.0
  %666 = vmatpush1.msra.mxu0 0.0
  %667 = vmatprep.subr.mxu0 0.0
  %668 = vmatpush1.msra.mxu0 0.0
  %669 = vmatprep.subr.mxu0 0.0
  %670 = vmatpush1.msra.mxu0 0.0
  %671 = vmatprep.subr.mxu0 0.0
  %672 = vmatpush1.msra.mxu0 0.0
  %673 = vmatprep.subr.mxu0 0.0
  %674 = vmatpush1.msra.mxu0 0.0
  %675 = vmatprep.subr.mxu0 0.0
  %676 = vmatpush1.msra.mxu0 0.0
  %677 = vmatprep.subr.mxu0 0.0
  %678 = vmatpush1.msra.mxu0 0.0
  %679 = vmatprep.subr.mxu0 0.0
  %680 = vmatpush1.msra.mxu0 0.0
  %681 = vmatprep.subr.mxu0 0.0
  %682 = vmatpush1.msra.mxu0 0.0
  %683 = vmatprep.subr.mxu0 0.0
  %684 = vmatpush1.msra.mxu0 0.0
  %685 = vmatprep.subr.mxu0 0.0
  %686 = vmatpush1.msra.mxu0 0.0
  %687 = vmatprep.subr.mxu0 0.0
  %688 = vmatpush1.msra.mxu0 0.0
  %689 = vmatprep.mubr.f32.mxu0 0.0
  %690 = vmatmul.mubr.f32.gmra.mrb[0].mxu0 %v623
  %v691 = vpop.f32.mrb[0].mxu0
  %v692 = vadd.f32 0.0, %v691
  %v693 = vpop.f32.mrb[0].mxu0
  %694 = vdwg.mxu0
  %v695 = vadd.f32 %v619, %v692
  %v696 = vxor.u32 %v695, 2147483648
  %v697 = vmul.f32 %v696, 1.442695
  %v698 = vpow.pop %v697
  %v699 = vadd.f32 %v698, 1.0
  %v700 = vrcp.pop %v699
  %v701 = vmul.f32 1.0, %v700
  %v702 = vtanh.pop %v695
  %v703 = vmul.f32 %v701, %v611
  %705 = vrot.lane.b32.xlu0 %v702, 64
  %v706 = vpop.permute.xlu0 %705
  %v708 = vmul.f32 %v701, %v706
  %710 = vrot.lane.b32.xlu0 %v708, 32
  %v711 = vpop.permute.xlu0 %710
  %v713 = vadd.f32 %v703, %v711
  %v714 = vtanh.pop %v713
  %716 = vrot.lane.b32.xlu0 %v714, 64
  %v717 = vpop.permute.xlu0 %716
  %v719 = vmul.f32 %v701, %v717
  %v720 = vld [vmem:[%s8] sm:$0xff]
  %v721 = vld [vmem:[%s8 + $0x8] sm:$0xff]
  %v722 = vld [vmem:[%s8 + $0x10] sm:$0xff]
  %v723 = vld [vmem:[%s8 + $0x18] sm:$0xff]
  %v724 = vld [vmem:[%s9] sm:$0x1]
  %v726 = vlaneseq
  %v727 = vshrl.u32 %v726, 7
  %v728 = vsub.s32 0, %v727
  %v729 = vrot.slane %v724, %v728
  %732 = vrot.lane.b32.xlu0 %v719, 32
  %v733 = vpop.permute.xlu0 %732
  %v734 = vsel %vm115, %v733, 0
  %736 = vmatprep.subr.mxu0 0.0
  %737 = vmatpush1.msra.mxu0 %v720
  %738 = vmatprep.subr.mxu0 0.0
  %739 = vmatpush1.msra.mxu0 %v721
  %740 = vmatprep.subr.mxu0 0.0
  %741 = vmatpush1.msra.mxu0 %v722
  %742 = vmatprep.subr.mxu0 0.0
  %743 = vmatpush1.msra.mxu0 %v723
  %744 = vmatprep.subr.mxu0 0.0
  %745 = vmatpush1.msra.mxu0 0.0
  %746 = vmatprep.subr.mxu0 0.0
  %747 = vmatpush1.msra.mxu0 0.0
  %748 = vmatprep.subr.mxu0 0.0
  %749 = vmatpush1.msra.mxu0 0.0
  %750 = vmatprep.subr.mxu0 0.0
  %751 = vmatpush1.msra.mxu0 0.0
  %752 = vmatprep.subr.mxu0 0.0
  %753 = vmatpush1.msra.mxu0 0.0
  %754 = vmatprep.subr.mxu0 0.0
  %755 = vmatpush1.msra.mxu0 0.0
  %756 = vmatprep.subr.mxu0 0.0
  %757 = vmatpush1.msra.mxu0 0.0
  %758 = vmatprep.subr.mxu0 0.0
  %759 = vmatpush1.msra.mxu0 0.0
  %760 = vmatprep.subr.mxu0 0.0
  %761 = vmatpush1.msra.mxu0 0.0
  %762 = vmatprep.subr.mxu0 0.0
  %763 = vmatpush1.msra.mxu0 0.0
  %764 = vmatprep.subr.mxu0 0.0
  %765 = vmatpush1.msra.mxu0 0.0
  %766 = vmatprep.subr.mxu0 0.0
  %767 = vmatpush1.msra.mxu0 0.0
  %768 = vmatprep.subr.mxu0 0.0
  %769 = vmatpush1.msra.mxu0 0.0
  %770 = vmatprep.subr.mxu0 0.0
  %771 = vmatpush1.msra.mxu0 0.0
  %772 = vmatprep.subr.mxu0 0.0
  %773 = vmatpush1.msra.mxu0 0.0
  %774 = vmatprep.subr.mxu0 0.0
  %775 = vmatpush1.msra.mxu0 0.0
  %776 = vmatprep.subr.mxu0 0.0
  %777 = vmatpush1.msra.mxu0 0.0
  %778 = vmatprep.subr.mxu0 0.0
  %779 = vmatpush1.msra.mxu0 0.0
  %780 = vmatprep.subr.mxu0 0.0
  %781 = vmatpush1.msra.mxu0 0.0
  %782 = vmatprep.subr.mxu0 0.0
  %783 = vmatpush1.msra.mxu0 0.0
  %784 = vmatprep.subr.mxu0 0.0
  %785 = vmatpush1.msra.mxu0 0.0
  %786 = vmatprep.subr.mxu0 0.0
  %787 = vmatpush1.msra.mxu0 0.0
  %788 = vmatprep.subr.mxu0 0.0
  %789 = vmatpush1.msra.mxu0 0.0
  %790 = vmatprep.subr.mxu0 0.0
  %791 = vmatpush1.msra.mxu0 0.0
  %792 = vmatprep.subr.mxu0 0.0
  %793 = vmatpush1.msra.mxu0 0.0
  %794 = vmatprep.subr.mxu0 0.0
  %795 = vmatpush1.msra.mxu0 0.0
  %796 = vmatprep.subr.mxu0 0.0
  %797 = vmatpush1.msra.mxu0 0.0
  %798 = vmatprep.subr.mxu0 0.0
  %799 = vmatpush1.msra.mxu0 0.0
  %800 = vmatprep.mubr.f32.mxu0 0.0
  %801 = vmatmul.mubr.f32.gmra.mrb[0].mxu0 %v734
  %v802 = vpop.f32.mrb[0].mxu0
  %v803 = vadd.f32 %v729, %v802
  %v804 = vpop.f32.mrb[0].mxu0
  %805 = vdwg.mxu0
  %806 = vst [vmem:[%s10] sm:$0xff] %v803
  // Predicated region
  $region42: #{cnn_lstm_forward.1} parent=0 // pred_check
    _
  $region43: #{cnn_lstm_forward.1} parent=0 // pred_check_branch
    %808 = sbr.rel (0) target = $region45
  $region44: #{cnn_lstm_forward.1} parent=0 // pred_region
    _
  $region45: #{cnn_lstm_forward.1} parent=0 // pred_fallthru
    _
  // Predicated region
  $region46: #{cnn_lstm_forward.1} parent=0 // pred_check
    _
  $region47: #{cnn_lstm_forward.1} parent=0 // pred_check_branch
    %810 = sbr.rel (0) target = $region49
  $region48: #{cnn_lstm_forward.1} parent=0 // pred_region
    _
  $region49: #{cnn_lstm_forward.1} parent=0 // pred_fallthru
    _

</llo_original>
